<compile_context>
chip_gen: v6e
topology: v6e:2x2x1
jax: 0.10.0
libtpu: 0.0.40
codegen_flags: <defaults>
</compile_context>

<pallas_src>
import jax
import jax.numpy as jnp
from jax.experimental import pallas as pl
from jax.experimental.pallas import tpu as pltpu

_MAX_LANES = 1024  # widest lane-dense last dim we try (multiple of 128)


def _copy_kernel(x_ref, o_ref):
    # Identity copy of the current tile (the only HBM-heavy work of a
    # materialized .view()).
    o_ref[...] = x_ref[...]


def _sublane_multiple(dtype):
    itemsize = jnp.dtype(dtype).itemsize
    return {4: 8, 2: 16, 1: 32}.get(itemsize, 8)


def _pick_tile_bytes():
    """Largest per-buffer tile such that 4 buffers stay well inside VMEM."""
    try:
        vmem = pltpu.get_tpu_info().vmem_capacity_bytes
    except Exception:
        vmem = 64 << 20  # conservative (v7x per-TC) if query unavailable
    # 4 buffers (in/out x double-buffer) ~= vmem/4 total -> tile = vmem/16,
    # clamped to [2 MiB, 8 MiB].
    return max(2 << 20, min(8 << 20, vmem // 16))


def _pick_lanes(total):
    """Largest multiple of 128 (<= _MAX_LANES) dividing total; 0 if none."""
    lanes = 0
    cand = 128
    while cand <= min(total, _MAX_LANES):
        if total % cand == 0:
            lanes = cand
        cand += 128
    return lanes


def _pallas_copy_2d(flat2d, tile_rows, payload_bytes):
    rows, lanes = flat2d.shape
    itemsize = jnp.dtype(flat2d.dtype).itemsize
    tile_bytes = tile_rows * lanes * itemsize
    # Headroom above the 4-buffer footprint; never below any chip's scoped
    # default so we don't tighten the compiler's budget.
    vmem_limit = int(max(32 << 20, 5 * tile_bytes))
    grid = (pl.cdiv(rows, tile_rows),)
    return pl.pallas_call(
        _copy_kernel,
        out_shape=jax.ShapeDtypeStruct((rows, lanes), flat2d.dtype),
        grid_spec=pltpu.PrefetchScalarGridSpec(
            num_scalar_prefetch=0,
            grid=grid,
            in_specs=[pl.BlockSpec((tile_rows, lanes), lambda i: (i, 0))],
            out_specs=pl.BlockSpec((tile_rows, lanes), lambda i: (i, 0)),
        ),
        compiler_params=pltpu.CompilerParams(
            dimension_semantics=("parallel",),  # split copy across TCs on v7x
            vmem_limit_bytes=vmem_limit,
        ),
        cost_estimate=pl.CostEstimate(
            flops=0,
            transcendentals=0,
            bytes_accessed=int(2 * payload_bytes),
        ),
    )(flat2d)


def reshape_to_img(x, target_shape, *, materialize=True):
    """Equivalent of ReshapeToImg(target_shape)(x) == x.view(*target_shape).

    materialize=False is the zero-cost path (metadata-only reshape, like a
    torch .view alias).  materialize=True moves the bytes once through a
    pipelined Pallas copy and returns a fresh buffer.
    """
    total = 1
    for d in x.shape:
        total *= d
    tgt_total = 1
    for d in target_shape:
        tgt_total *= d
    assert total == tgt_total, "view(): total element count must match"

    if not materialize or total == 0:
        return jnp.reshape(x, target_shape)

    itemsize = jnp.dtype(x.dtype).itemsize
    sub_m = _sublane_multiple(x.dtype)
    tile_bytes = _pick_tile_bytes()

    lanes = _pick_lanes(total)
    flat = x.reshape(-1)
    pad = 0
    if lanes == 0:
        # TODO(synk): totals not divisible by 128 still need one pad + slice
        # pass; unavoidable without a masked 1D tail kernel.
        lanes = 128
        padded = ((total + lanes - 1) // lanes) * lanes
        pad = padded - total
        flat = jnp.pad(flat, (0, pad))

    rows = flat.shape[0] // lanes
    flat2d = flat.reshape(rows, lanes)

    # Rows per tile: as many as fit the per-generation tile budget, rounded to
    # the dtype's packed sublane multiple; single full-height block if the
    # whole slab fits (block equal to the array dim is always layout-legal).
    target_rows = max(sub_m, (tile_bytes // (lanes * itemsize)) // sub_m * sub_m)
    tile_rows = rows if rows <= target_rows else target_rows

    copied = _pallas_copy_2d(flat2d, tile_rows, total * itemsize)

    out = copied.reshape(-1)
    if pad:
        out = out[:total]
    return out.reshape(target_shape)


if __name__ == "__main__":
    key = jax.random.PRNGKey(0)
    # Flat feature input (as from a linear decoder) reshaped back to an NCHW
    # image: (2, 1024) -> (2, 4, 16, 16).
    x = jax.random.normal(key, (2, 1024), dtype=jnp.float32)
    target_shape = (2, 4, 16, 16)

    out = jax.block_until_ready(reshape_to_img(x, target_shape, materialize=True))

    # Semantics check against plain JAX reshape (same element order as .view()).
    ref = x.reshape(target_shape)
    assert out.shape == target_shape
    assert out.dtype == x.dtype
    assert bool(jnp.array_equal(out, ref))

    # Zero-cost metadata path also matches.
    out_view = jax.block_until_ready(reshape_to_img(x, target_shape, materialize=False))
    assert bool(jnp.array_equal(out_view, ref))

    print("KERNEL_OK")
</pallas_src>

<mosaic_0001>
module attributes {stable_mosaic.version = 11 : i64} {
  func.func @_copy_kernel(%arg0: i32, %arg1: memref<2x1024xf32, #tpu.memory_space<vmem>>, %arg2: memref<2x1024xf32, #tpu.memory_space<vmem>>) attributes {dimension_semantics = [#tpu.dimension_semantics<parallel>], iteration_bounds = array<i64: 1>, scalar_prefetch = 0 : i64, scratch_operands = 0 : i64, tpu.core_type = #tpu.core_type<tc>, window_params = [{transform_indices = @transform_0, window_bounds = array<i64: 2, 1024>}, {transform_indices = @transform_1, window_bounds = array<i64: 2, 1024>}]} {
    %c0 = arith.constant 0 : index
    %c0_0 = arith.constant 0 : index
    %0 = vector.load %arg1[%c0, %c0_0] : memref<2x1024xf32, #tpu.memory_space<vmem>>, vector<2x1024xf32>
    %c0_1 = arith.constant 0 : index
    %c0_2 = arith.constant 0 : index
    %1 = vector.load %arg2[%c0_1, %c0_2] : memref<2x1024xf32, #tpu.memory_space<vmem>>, vector<2x1024xf32>
    tpu.vector_store %arg2[%c0_1, %c0_2], %0 {strides = array<i32>} : memref<2x1024xf32, #tpu.memory_space<vmem>>, vector<2x1024xf32>,
    return
  }
  func.func @transform_0(%arg0: i32) -> (i32, i32) {
    %c0_i32 = arith.constant 0 : i32
    %c0_i32_0 = arith.constant 0 : i32
    return %arg0, %c0_i32 : i32, i32
  }
  func.func @transform_1(%arg0: i32) -> (i32, i32) {
    %c0_i32 = arith.constant 0 : i32
    %c0_i32_0 = arith.constant 0 : i32
    return %arg0, %c0_i32 : i32, i32
  }
}

</mosaic_0001>

<llo_original>
// kernel: tpu_custom_call.1
$region0: #{tpu_custom_call.1}
  #allocation0 [shape = 'u32[]', space=smem, size = 0x4, offset = 0x4, fixed_abs, tag = 'smem constant byte address 0x4 - core index']
  #allocation1 [shape = 'u32[144,128]{1,0:T(1,128)}', space=vmem, size = 0x12000, scoped, tag = 'internal scratch']
  %s0 = inlined_call_operand.hbm [shape: f32[2,1024], index: 0, kind: input, shape index: {}]
  %s1 = inlined_call_operand.hbm [shape: f32[2,1024], index: 1, kind: output, shape index: {}]
  %s2 = sld [smem:[#allocation0]]
  $region18: #{tpu_custom_call.1} parent=0
    _
  %s4 = ssub.s32 1, %s2
  %s5 = scalar_select 0, %s4, %s2
  $region1: #{tpu_custom_call.1} parent=0
    #allocation2 [shape = 'u8[8192]{0}', space=vmem, size = 0x2000, scoped, tag = 'input window, operand 0, single buffered']
    #allocation3 [shape = 's32[1]{0}', space=sflag, size = 0x4, scoped, tag = 'scoped memory for tpu_custom_call.1']
    #allocation4 [shape = 's32[1]{0}', space=sflag, size = 0x4, scoped, tag = 'scoped memory for tpu_custom_call.1']
    #allocation5 [shape = 'u8[8192]{0}', space=vmem, size = 0x2000, scoped, tag = 'output window, operand 0, single buffered']
    %6 = vsyncpa [#allocation3], 0
    %7 = vsyncpa [#allocation4], 0
    // Predicated region
    $region2: #{tpu_custom_call.1} parent=1 // pred_check
      _
    $region3: #{tpu_custom_call.1} parent=1 // pred_check_branch
      %9 = sbr.rel (0) target = $region5
    $region4: #{tpu_custom_call.1} parent=1 // pred_region
      %s11 = ssub.s32 256, 256
      %12 = vsyncadd [#allocation3], %s11
      %s14 = sshll.u32 [#allocation2], 4
      %s15 = int_to_ptr.vmem [resolvable:$true] %s14
      %17 = dma.hbm_to_vmem [thread:$0]  %s0, 256, %s15, [#allocation3]
    $region5: #{tpu_custom_call.1} parent=1 // pred_fallthru
      _
    // Predicated region
    $region6: #{tpu_custom_call.1} parent=1 // pred_check
      _
    $region7: #{tpu_custom_call.1} parent=1 // pred_check_branch
      %19 = sbr.rel (0) target = $region9
    $region8: #{tpu_custom_call.1} parent=1 // pred_region
      %20 = dma.done [#allocation3], 256
    $region9: #{tpu_custom_call.1} parent=1 // pred_fallthru
      _
    %v21 = vld [vmem:[#allocation2] sm:$0xff]
    %v22 = vld [vmem:[#allocation2 + $0x8] sm:$0xff]
    %23 = vst [vmem:[#allocation5] sm:$0xff] %v21
    %24 = vst [vmem:[#allocation5 + $0x8] sm:$0xff] %v22
    // Predicated region
    $region10: #{tpu_custom_call.1} parent=1 // pred_check
      _
    $region11: #{tpu_custom_call.1} parent=1 // pred_check_branch
      %26 = sbr.rel (0) target = $region13
    $region12: #{tpu_custom_call.1} parent=1 // pred_region
      %s28 = ssub.s32 256, 256
      %29 = vsyncadd [#allocation4], %s28
      %s31 = sshll.u32 [#allocation5], 4
      %s32 = int_to_ptr.vmem [resolvable:$true] %s31
      %34 = dma.vmem_to_hbm [thread:$0]  %s32, 256, %s1, [#allocation4]
    $region13: #{tpu_custom_call.1} parent=1 // pred_fallthru
      _
    // Predicated region
    $region14: #{tpu_custom_call.1} parent=1 // pred_check
      _
    $region15: #{tpu_custom_call.1} parent=1 // pred_check_branch
      %36 = sbr.rel (0) target = $region17
    $region16: #{tpu_custom_call.1} parent=1 // pred_region
      %37 = dma.done [#allocation4], 256
    $region17: #{tpu_custom_call.1} parent=1 // pred_fallthru
      _
    %38 = vsyncpa [#allocation3], 1
    %39 = vsyncpa [#allocation4], 1

</llo_original>
